<compile_context>
chip_gen: v6e
topology: v6e:2x2x1
jax: 0.10.0
libtpu: 0.0.40
codegen_flags: <defaults>
</compile_context>

<pallas_src>
import jax
import jax.numpy as jnp
from jax.experimental import pallas as pl
from jax.experimental.pallas import tpu as pltpu


def _round_up(n, m):
    return ((n + m - 1) // m) * m


def ann_kernel(x_ref, w1_ref, b1_ref, w2r_ref, b2_ref, o_ref):
    # x tile: [TM, F] f32 streamed from HBM; cast to bf16 in VMEM for the MXU.
    x = x_ref[...].astype(jnp.bfloat16)

    # fc1: bf16 MXU matmul with f32 accumulation; bias + ReLU in f32 (VPU).
    h = jnp.dot(x, w1_ref[...], preferred_element_type=jnp.float32)      # [TM, H]
    h = jnp.maximum(h + b1_ref[...], 0.0)

    # TODO(synk): mcdropout.Dropout (always-active MC dropout) omitted; this is the
    #             deterministic eval / p=0 path.  If needed, add in-kernel
    #             pltpu.prng_seed + pltpu.prng_random_bits masks.

    # fc2 as a transposed (NT) matmul in bf16: [1, H] x [TM, H]^T -> [1, TM].
    # Lane-dense result (TM along the 128 lanes, unmasked full-width stores)
    # instead of an N=1 column matmul followed by masked width-1 stores.
    y = jax.lax.dot_general(
        w2r_ref[...], h.astype(jnp.bfloat16),
        dimension_numbers=(((1,), (1,)), ((), ())),
        preferred_element_type=jnp.float32)                               # [1, TM]
    y = y + b2_ref[0, 0]                                                  # scalar bias (SMEM)

    # sigmoid (EUP) + lane-dense store into the (1, 1, TM) output block.
    o_ref[0] = jax.nn.sigmoid(y).astype(o_ref.dtype)


def _choose_tm(batch, n_features, *, target_tile_bytes=2 << 20, max_tm=32768):
    # Rows per tile so the f32 x tile is ~target_tile_bytes (amortizes the
    # ~0.35 us per-grid-step overhead); multiple of 128 for lane-dense output.
    tm = max(128, (target_tile_bytes // (n_features * 4)) // 128 * 128)
    tm = min(tm, max_tm)
    if batch > 128:
        # Keep >= 2 tiles so the "parallel" batch axis can be split across
        # v7x's two TensorCores.
        tm = min(tm, _round_up(pl.cdiv(batch, 2), 128))
    tm = min(tm, _round_up(batch, 128))
    return tm


def ann_forward(x, w1, b1, w2, b2):
    B, F = x.shape
    H = w1.shape[1]

    tm = _choose_tm(B, F)
    num_tiles = pl.cdiv(B, tm)
    b_total = num_tiles * tm

    # Only tiny batches (B < one tile) need padding (<= 127 rows, trivial).
    # Larger batches rely on Pallas partial blocks for the ragged tail.
    if B < tm:
        x = jnp.pad(x, ((0, tm - B), (0, 0)))

    # Params: bf16 for the MXU matmuls; tiny and VMEM-resident across grid steps.
    w1_bf = w1.astype(jnp.bfloat16)
    b1_f32 = b1.astype(jnp.float32).reshape(1, H)
    w2_row = w2.astype(jnp.bfloat16).reshape(1, H)   # fc2 weights as a [1, H] row
    b2_s = b2.astype(jnp.float32).reshape(1, 1)      # scalar bias -> SMEM

    cost = pl.CostEstimate(
        flops=2 * b_total * F * H + 2 * b_total * H,
        transcendentals=b_total,
        bytes_accessed=b_total * F * 4 + F * H * 2 + H * 6 + 4 + b_total * 4,
    )

    out = pl.pallas_call(
        ann_kernel,
        out_shape=jax.ShapeDtypeStruct((num_tiles, 1, tm), jnp.float32),
        grid=(num_tiles,),
        in_specs=[
            pl.BlockSpec((tm, F), lambda i: (i, 0)),            # streamed f32 x tiles
            pl.BlockSpec((F, H), lambda i: (0, 0)),             # resident W1 (bf16)
            pl.BlockSpec((1, H), lambda i: (0, 0)),             # resident b1 (f32)
            pl.BlockSpec((1, H), lambda i: (0, 0)),             # resident W2 row (bf16)
            pl.BlockSpec(memory_space=pltpu.MemorySpace.SMEM),  # b2 scalar
        ],
        out_specs=pl.BlockSpec((1, 1, tm), lambda i: (i, 0, 0)),
        compiler_params=pltpu.CompilerParams(
            dimension_semantics=("parallel",),
            vmem_limit_bytes=32 * 1024 * 1024),
        cost_estimate=cost,
    )(x, w1_bf, b1_f32, w2_row, b2_s)

    # Lane-dense (num_tiles, 1, TM) slab -> (B, 1)
    return out.reshape(b_total, 1)[:B]


def init_params(key, n_features):
    hidden = int(n_features / 2)
    k1, k2, k3, k4 = jax.random.split(key, 4)
    # PyTorch-Linear-style uniform(-1/sqrt(fan_in), 1/sqrt(fan_in))
    bound1 = 1.0 / jnp.sqrt(jnp.float32(n_features))
    bound2 = 1.0 / jnp.sqrt(jnp.float32(hidden))
    w1 = jax.random.uniform(k1, (n_features, hidden), jnp.float32, -bound1, bound1)
    b1 = jax.random.uniform(k2, (1, hidden), jnp.float32, -bound1, bound1)
    w2 = jax.random.uniform(k3, (hidden, 1), jnp.float32, -bound2, bound2)
    b2 = jax.random.uniform(k4, (1, 1), jnp.float32, -bound2, bound2)
    return w1, b1, w2, b2


def _reference(x, w1, b1, w2, b2):
    h = jnp.maximum(x @ w1 + b1, 0.0)
    return jax.nn.sigmoid(h @ w2 + b2)


if __name__ == "__main__":
    key = jax.random.PRNGKey(0)
    kx, kx2, kp = jax.random.split(key, 3)

    batch = 8
    n_features = 32           # -> hidden = 16, output = 1

    w1, b1, w2, b2 = init_params(kp, n_features)

    # Small batch (single padded tile).
    x = jax.random.normal(kx, (batch, n_features), dtype=jnp.float32)
    y = ann_forward(x, w1, b1, w2, b2)
    jax.block_until_ready(y)
    y_ref = _reference(x, w1, b1, w2, b2)
    assert y.shape == (batch, 1)
    assert jnp.allclose(y, y_ref, atol=2e-2), float(jnp.max(jnp.abs(y - y_ref)))

    # Larger ragged batch (multi-tile, unpadded partial last block).
    batch2 = 300
    x2 = jax.random.normal(kx2, (batch2, n_features), dtype=jnp.float32)
    y2 = ann_forward(x2, w1, b1, w2, b2)
    jax.block_until_ready(y2)
    y2_ref = _reference(x2, w1, b1, w2, b2)
    assert y2.shape == (batch2, 1)
    assert jnp.allclose(y2, y2_ref, atol=2e-2), float(jnp.max(jnp.abs(y2 - y2_ref)))

    print("KERNEL_OK")
</pallas_src>

<mosaic_0001>
module attributes {stable_mosaic.version = 11 : i64} {
  func.func @ann_kernel(%arg0: i32, %arg1: memref<128x32xf32, #tpu.memory_space<vmem>>, %arg2: memref<32x16xbf16, #tpu.memory_space<vmem>>, %arg3: memref<1x16xf32, #tpu.memory_space<vmem>>, %arg4: memref<1x16xbf16, #tpu.memory_space<vmem>>, %arg5: memref<1x1xf32, #tpu.memory_space<smem>>, %arg6: memref<1x1x128xf32, #tpu.memory_space<vmem>>) attributes {dimension_semantics = [#tpu.dimension_semantics<parallel>], iteration_bounds = array<i64: 1>, scalar_prefetch = 0 : i64, scratch_operands = 0 : i64, tpu.core_type = #tpu.core_type<tc>, window_params = [{transform_indices = @transform_0, window_bounds = array<i64: 128, 32>}, {pipeline_mode = #tpu.pipeline_mode<synchronous>, transform_indices = @transform_1, window_bounds = array<i64: 32, 16>}, {pipeline_mode = #tpu.pipeline_mode<synchronous>, transform_indices = @transform_2, window_bounds = array<i64: 1, 16>}, {pipeline_mode = #tpu.pipeline_mode<synchronous>, transform_indices = @transform_3, window_bounds = array<i64: 1, 16>}, {transform_indices = @transform_4, window_bounds = array<i64: 1, 1>}, {transform_indices = @transform_5, window_bounds = array<i64: 1, 1, 128>}]} {
    %c0 = arith.constant 0 : index
    %c0_0 = arith.constant 0 : index
    %0 = vector.load %arg1[%c0, %c0_0] : memref<128x32xf32, #tpu.memory_space<vmem>>, vector<128x32xf32>
    %1 = arith.truncf %0 : vector<128x32xf32> to vector<128x32xbf16>
    %c0_1 = arith.constant 0 : index
    %c0_2 = arith.constant 0 : index
    %2 = vector.load %arg2[%c0_1, %c0_2] : memref<32x16xbf16, #tpu.memory_space<vmem>>, vector<32x16xbf16>
    %cst = arith.constant dense<0.000000e+00> : vector<128x16xf32>
    %3 = tpu.matmul %1, %2, %cst {dimension_numbers = #tpu.dot_dimension_numbers<[1], [0], [0], [1], [0, 0, 1, 1], [], []>} : vector<128x32xbf16>, vector<32x16xbf16>, vector<128x16xf32> -> vector<128x16xf32>
    %c0_3 = arith.constant 0 : index
    %c0_4 = arith.constant 0 : index
    %4 = vector.load %arg3[%c0_3, %c0_4] : memref<1x16xf32, #tpu.memory_space<vmem>>, vector<1x16xf32>
    %5 = vector.broadcast %4 : vector<1x16xf32> to vector<128x16xf32>
    %6 = arith.addf %3, %5 : vector<128x16xf32>
    %cst_5 = arith.constant 0.000000e+00 : f32
    %7 = vector.broadcast %cst_5 : f32 to vector<128x16xf32>
    %8 = arith.maximumf %6, %7 : vector<128x16xf32>
    %c0_6 = arith.constant 0 : index
    %c0_7 = arith.constant 0 : index
    %9 = vector.load %arg4[%c0_6, %c0_7] : memref<1x16xbf16, #tpu.memory_space<vmem>>, vector<1x16xbf16>
    %10 = arith.truncf %8 : vector<128x16xf32> to vector<128x16xbf16>
    %cst_8 = arith.constant dense<0.000000e+00> : vector<1x128xf32>
    %11 = tpu.matmul %9, %10, %cst_8 {dimension_numbers = #tpu.dot_dimension_numbers<[1], [1], [0], [0], [0, 0, 1, 0], [], []>} : vector<1x16xbf16>, vector<128x16xbf16>, vector<1x128xf32> -> vector<1x128xf32>
    %c0_9 = arith.constant 0 : index
    %c0_10 = arith.constant 0 : index
    %12 = memref.load %arg5[%c0_9, %c0_10] : memref<1x1xf32, #tpu.memory_space<smem>>
    %13 = vector.broadcast %12 : f32 to vector<1x128xf32>
    %14 = arith.addf %11, %13 : vector<1x128xf32>
    %15 = arith.negf %14 : vector<1x128xf32>
    %16 = math.exp %15 : vector<1x128xf32>
    %cst_11 = arith.constant 1.000000e+00 : f32
    %17 = vector.broadcast %cst_11 : f32 to vector<1x128xf32>
    %18 = arith.addf %17, %16 : vector<1x128xf32>
    %19 = arith.divf %17, %18 : vector<1x128xf32>
    %c0_12 = arith.constant 0 : index
    %c0_13 = arith.constant 0 : index
    %c0_14 = arith.constant 0 : index
    %20 = vector.load %arg6[%c0_12, %c0_13, %c0_14] : memref<1x1x128xf32, #tpu.memory_space<vmem>>, vector<1x1x128xf32>
    %21 = vector.shape_cast %20 : vector<1x1x128xf32> to vector<1x128xf32>
    %22 = vector.shape_cast %19 : vector<1x128xf32> to vector<1x1x128xf32>
    tpu.vector_store %arg6[%c0_12, %c0_13, %c0_14], %22 {strides = array<i32>} : memref<1x1x128xf32, #tpu.memory_space<vmem>>, vector<1x1x128xf32>,
    return
  }
  func.func @transform_0(%arg0: i32) -> (i32, i32) {
    %c0_i32 = arith.constant 0 : i32
    %c0_i32_0 = arith.constant 0 : i32
    return %arg0, %c0_i32 : i32, i32
  }
  func.func @transform_1(%arg0: i32) -> (i32, i32) {
    %c0_i32 = arith.constant 0 : i32
    %c0_i32_0 = arith.constant 0 : i32
    %c0_i32_1 = arith.constant 0 : i32
    return %c0_i32, %c0_i32_0 : i32, i32
  }
  func.func @transform_2(%arg0: i32) -> (i32, i32) {
    %c0_i32 = arith.constant 0 : i32
    %c0_i32_0 = arith.constant 0 : i32
    %c0_i32_1 = arith.constant 0 : i32
    return %c0_i32, %c0_i32_0 : i32, i32
  }
  func.func @transform_3(%arg0: i32) -> (i32, i32) {
    %c0_i32 = arith.constant 0 : i32
    %c0_i32_0 = arith.constant 0 : i32
    %c0_i32_1 = arith.constant 0 : i32
    return %c0_i32, %c0_i32_0 : i32, i32
  }
  func.func @transform_4(%arg0: i32) -> (i32, i32) {
    %c0_i32 = arith.constant 0 : i32
    %c0_i32_0 = arith.constant 0 : i32
    %c0_i32_1 = arith.constant 0 : i32
    return %c0_i32, %c0_i32_0 : i32, i32
  }
  func.func @transform_5(%arg0: i32) -> (i32, i32, i32) {
    %c0_i32 = arith.constant 0 : i32
    %c0_i32_0 = arith.constant 0 : i32
    %c0_i32_1 = arith.constant 0 : i32
    return %arg0, %c0_i32, %c0_i32_0 : i32, i32, i32
  }
}

</mosaic_0001>

<llo_original>
// kernel: tpu_custom_call.1
$region0: #{tpu_custom_call.1}
  #allocation0 [shape = 'u32[]', space=smem, size = 0x4, offset = 0x4, fixed_abs, tag = 'smem constant byte address 0x4 - core index']
  #allocation1 [shape = 'u32[144,128]{1,0:T(1,128)}', space=vmem, size = 0x12000, scoped, tag = 'internal scratch']
  #allocation2 [shape = 'f32[1,1]{1,0:T(1,128)S(6)}', space=smem, size = 0x200, scoped, tag = 'scoped memory for tpu_custom_call.1']
  %s0 = inlined_call_operand.vmem [shape: f32[128,32], index: 0, kind: input, shape index: {}]
  %s1 = inlined_call_operand.vmem [shape: bf16[32,16], index: 1, kind: input, shape index: {}]
  %s2 = inlined_call_operand.vmem [shape: f32[1,16], index: 2, kind: input, shape index: {}]
  %s3 = inlined_call_operand.vmem [shape: bf16[1,16], index: 3, kind: input, shape index: {}]
  %s4 = inlined_call_operand.<no memory space> [shape: f32[1,1], index: 4, kind: input, shape index: {}]
  %s5 = inlined_call_operand.hbm [shape: f32[1,1,128], index: 5, kind: output, shape index: {}]
  %s6 = sld [smem:[#allocation0]]
  $region30: #{tpu_custom_call.1} parent=0
    _
  %s8 = ssub.s32 1, %s6
  %s9 = scalar_select 0, %s8, %s6
  %10 = sst [smem:[#allocation2]] %s4
  $region1: #{tpu_custom_call.1} parent=0
    #allocation3 [shape = 'u8[512]{0}', space=vmem, size = 0x400, scoped, tag = 'output window, operand 0, single buffered']
    #allocation4 [shape = 's32[1]{0}', space=sflag, size = 0x4, scoped, tag = 'scoped memory for tpu_custom_call.1']
    %11 = vsyncpa [#allocation4], 0
    // Predicated region
    $region2: #{tpu_custom_call.1} parent=1 // pred_check
      _
    $region3: #{tpu_custom_call.1} parent=1 // pred_check_branch
      %13 = sbr.rel (0) target = $region5
    $region4: #{tpu_custom_call.1} parent=1 // pred_region
      _
    $region5: #{tpu_custom_call.1} parent=1 // pred_fallthru
      _
    // Predicated region
    $region6: #{tpu_custom_call.1} parent=1 // pred_check
      _
    $region7: #{tpu_custom_call.1} parent=1 // pred_check_branch
      %15 = sbr.rel (0) target = $region9
    $region8: #{tpu_custom_call.1} parent=1 // pred_region
      _
    $region9: #{tpu_custom_call.1} parent=1 // pred_fallthru
      _
    // Predicated region
    $region10: #{tpu_custom_call.1} parent=1 // pred_check
      _
    $region11: #{tpu_custom_call.1} parent=1 // pred_check_branch
      %17 = sbr.rel (0) target = $region13
    $region12: #{tpu_custom_call.1} parent=1 // pred_region
      _
    $region13: #{tpu_custom_call.1} parent=1 // pred_fallthru
      _
    // Predicated region
    $region14: #{tpu_custom_call.1} parent=1 // pred_check
      _
    $region15: #{tpu_custom_call.1} parent=1 // pred_check_branch
      %19 = sbr.rel (0) target = $region17
    $region16: #{tpu_custom_call.1} parent=1 // pred_region
      _
    $region17: #{tpu_custom_call.1} parent=1 // pred_fallthru
      _
    // Predicated region
    $region18: #{tpu_custom_call.1} parent=1 // pred_check
      _
    $region19: #{tpu_custom_call.1} parent=1 // pred_check_branch
      %21 = sbr.rel (0) target = $region21
    $region20: #{tpu_custom_call.1} parent=1 // pred_region
      _
    $region21: #{tpu_custom_call.1} parent=1 // pred_fallthru
      _
    %v23 = vld [vmem:[%s0] sm:$0xff]
    %v24 = vld [vmem:[%s0 + $0x8] sm:$0xff]
    %v25 = vld [vmem:[%s0 + $0x10] sm:$0xff]
    %v26 = vld [vmem:[%s0 + $0x18] sm:$0xff]
    %v27 = vld [vmem:[%s0 + $0x20] sm:$0xff]
    %v28 = vld [vmem:[%s0 + $0x28] sm:$0xff]
    %v29 = vld [vmem:[%s0 + $0x30] sm:$0xff]
    %v30 = vld [vmem:[%s0 + $0x38] sm:$0xff]
    %v31 = vld [vmem:[%s0 + $0x40] sm:$0xff]
    %v32 = vld [vmem:[%s0 + $0x48] sm:$0xff]
    %v33 = vld [vmem:[%s0 + $0x50] sm:$0xff]
    %v34 = vld [vmem:[%s0 + $0x58] sm:$0xff]
    %v35 = vld [vmem:[%s0 + $0x60] sm:$0xff]
    %v36 = vld [vmem:[%s0 + $0x68] sm:$0xff]
    %v37 = vld [vmem:[%s0 + $0x70] sm:$0xff]
    %v38 = vld [vmem:[%s0 + $0x78] sm:$0xff]
    %v39 = vpack.c.bf16 %v24, %v23
    %v40 = vpack.c.bf16 %v26, %v25
    %v41 = vpack.c.bf16 %v28, %v27
    %v42 = vpack.c.bf16 %v30, %v29
    %v43 = vpack.c.bf16 %v32, %v31
    %v44 = vpack.c.bf16 %v34, %v33
    %v45 = vpack.c.bf16 %v36, %v35
    %v46 = vpack.c.bf16 %v38, %v37
    %v47 = vld [vmem:[%s1] sm:$0xf]
    %v48 = vld [vmem:[%s1 + $0x4] sm:$0xf]
    %v49 = vld [vmem:[%s1 + $0x8] sm:$0xf]
    %v50 = vld [vmem:[%s1 + $0xc] sm:$0xf]
    %v51 = vld [vmem:[%s2] sm:$0x1]
    %v53 = vlaneseq
    %v54 = vshrl.u32 %v53, 7
    %v55 = vsub.s32 0, %v54
    %v56 = vrot.slane %v51, %v55
    %v62 = vunpack.c.l.b16 %v47
    %v63 = vunpack.c.l.b16 %v48
    %v64 = vunpack.c.l.b16 %v49
    %v65 = vunpack.c.l.b16 %v50
    %v66 = vpack.c.b16 %v63, %v62
    %v67 = vpack.c.b16 %v65, %v64
    %vm70 = vcmask 261120
    %v72 = vsel %vm70, %v39, 0
    %v75 = vsel %vm70, %v40, 0
    %v78 = vsel %vm70, %v41, 0
    %v81 = vsel %vm70, %v42, 0
    %v84 = vsel %vm70, %v43, 0
    %v87 = vsel %vm70, %v44, 0
    %v90 = vsel %vm70, %v45, 0
    %v93 = vsel %vm70, %v46, 0
    %95 = vmatprep.subr.bf16.mxu0 0
    %96 = vmatpush1.bf16.msra.mxu0 0
    %97 = vmatprep.subr.bf16.mxu0 0
    %98 = vmatpush1.bf16.msra.mxu0 0
    %99 = vmatprep.subr.bf16.mxu0 0
    %100 = vmatpush1.bf16.msra.mxu0 0
    %101 = vmatprep.subr.bf16.mxu0 0
    %102 = vmatpush1.bf16.msra.mxu0 0
    %103 = vmatprep.subr.bf16.mxu0 0
    %104 = vmatpush1.bf16.msra.mxu0 0
    %105 = vmatprep.subr.bf16.mxu0 0
    %106 = vmatpush1.bf16.msra.mxu0 0
    %107 = vmatprep.subr.bf16.mxu0 0
    %108 = vmatpush1.bf16.msra.mxu0 %v67
    %109 = vmatprep.subr.bf16.mxu0 0
    %110 = vmatpush1.bf16.msra.mxu0 %v66
    %111 = vmatprep.subr.bf16.mxu0 0
    %112 = vmatpush2.bf16.msra.mxu0 0
    %113 = vmatprep.subr.bf16.mxu0 0
    %114 = vmatpush2.bf16.msra.mxu0 0
    %115 = vmatprep.subr.bf16.mxu0 0
    %116 = vmatpush2.bf16.msra.mxu0 0
    %117 = vmatprep.subr.bf16.mxu0 0
    %118 = vmatpush2.bf16.msra.mxu0 0
    %119 = vmatprep.subr.bf16.mxu0 0
    %120 = vmatpush2.bf16.msra.mxu0 0
    %121 = vmatprep.subr.bf16.mxu0 0
    %122 = vmatpush2.bf16.msra.mxu0 0
    %123 = vmatprep.subr.bf16.mxu0 0
    %124 = vmatpush2.bf16.msra.mxu0 0
    %125 = vmatprep.subr.bf16.mxu0 0
    %126 = vmatpush2.bf16.msra.mxu0 0
    %127 = vmatprep.mubr.bf16.mxu0 0
    %128 = vmatmul.mubr.bf16.gmra.mxu0 %v72
    %v129 = vpop.f32.mrf.mxu0
    %v130 = vadd.f32 %v56, %v129
    %v131 = vpop.f32.mrf.mxu0
    %v132 = vpop.f32.mrf.mxu0
    %v133 = vadd.f32 %v56, %v132
    %v134 = vpop.f32.mrf.mxu0
    %135 = vmatprep.mubr.bf16.mxu0 0
    %136 = vmatmul.mubr.bf16.gmra.mxu0 %v75
    %v137 = vpop.f32.mrf.mxu0
    %v138 = vadd.f32 %v56, %v137
    %v139 = vpop.f32.mrf.mxu0
    %v140 = vpop.f32.mrf.mxu0
    %v141 = vadd.f32 %v56, %v140
    %v142 = vpop.f32.mrf.mxu0
    %143 = vmatprep.mubr.bf16.mxu0 0
    %144 = vmatmul.mubr.bf16.gmra.mxu0 %v78
    %v145 = vpop.f32.mrf.mxu0
    %v146 = vadd.f32 %v56, %v145
    %v147 = vpop.f32.mrf.mxu0
    %v148 = vpop.f32.mrf.mxu0
    %v149 = vadd.f32 %v56, %v148
    %v150 = vpop.f32.mrf.mxu0
    %151 = vmatprep.mubr.bf16.mxu0 0
    %152 = vmatmul.mubr.bf16.gmra.mxu0 %v81
    %v153 = vpop.f32.mrf.mxu0
    %v154 = vadd.f32 %v56, %v153
    %v155 = vpop.f32.mrf.mxu0
    %v156 = vpop.f32.mrf.mxu0
    %v157 = vadd.f32 %v56, %v156
    %v158 = vpop.f32.mrf.mxu0
    %159 = vmatprep.mubr.bf16.mxu0 0
    %160 = vmatmul.mubr.bf16.gmra.mxu0 %v84
    %v161 = vpop.f32.mrf.mxu0
    %v162 = vadd.f32 %v56, %v161
    %v163 = vpop.f32.mrf.mxu0
    %v164 = vpop.f32.mrf.mxu0
    %v165 = vadd.f32 %v56, %v164
    %v166 = vpop.f32.mrf.mxu0
    %167 = vmatprep.mubr.bf16.mxu0 0
    %168 = vmatmul.mubr.bf16.gmra.mxu0 %v87
    %v169 = vpop.f32.mrf.mxu0
    %v170 = vadd.f32 %v56, %v169
    %v171 = vpop.f32.mrf.mxu0
    %v172 = vpop.f32.mrf.mxu0
    %v173 = vadd.f32 %v56, %v172
    %v174 = vpop.f32.mrf.mxu0
    %175 = vmatprep.mubr.bf16.mxu0 0
    %176 = vmatmul.mubr.bf16.gmra.mxu0 %v90
    %v177 = vpop.f32.mrf.mxu0
    %v178 = vadd.f32 %v56, %v177
    %v179 = vpop.f32.mrf.mxu0
    %v180 = vpop.f32.mrf.mxu0
    %v181 = vadd.f32 %v56, %v180
    %v182 = vpop.f32.mrf.mxu0
    %183 = vmatprep.mubr.bf16.mxu0 0
    %184 = vmatmul.mubr.bf16.gmra.mxu0 %v93
    %v185 = vpop.f32.mrf.mxu0
    %v186 = vadd.f32 %v56, %v185
    %v187 = vpop.f32.mrf.mxu0
    %v188 = vpop.f32.mrf.mxu0
    %v189 = vadd.f32 %v56, %v188
    %v190 = vpop.f32.mrf.mxu0
    %191 = vdwg.mxu0
    %v192 = vmax.f32 %v130, 0.0
    %v193 = vmax.f32 %v133, 0.0
    %v194 = vmax.f32 %v138, 0.0
    %v195 = vmax.f32 %v141, 0.0
    %v196 = vmax.f32 %v146, 0.0
    %v197 = vmax.f32 %v149, 0.0
    %v198 = vmax.f32 %v154, 0.0
    %v199 = vmax.f32 %v157, 0.0
    %v200 = vmax.f32 %v162, 0.0
    %v201 = vmax.f32 %v165, 0.0
    %v202 = vmax.f32 %v170, 0.0
    %v203 = vmax.f32 %v173, 0.0
    %v204 = vmax.f32 %v178, 0.0
    %v205 = vmax.f32 %v181, 0.0
    %v206 = vmax.f32 %v186, 0.0
    %v207 = vmax.f32 %v189, 0.0
    %v208 = vld [vmem:[%s3] sm:$0x1]
    %v209 = vpack.c.bf16 %v193, %v192
    %v210 = vpack.c.bf16 %v195, %v194
    %v211 = vpack.c.bf16 %v197, %v196
    %v212 = vpack.c.bf16 %v199, %v198
    %v213 = vpack.c.bf16 %v201, %v200
    %v214 = vpack.c.bf16 %v203, %v202
    %v215 = vpack.c.bf16 %v205, %v204
    %v216 = vpack.c.bf16 %v207, %v206
    %s217 = sld [smem:[#allocation2]]
    %v218 = vstv %s217
    %vm219 = vcmask 130048
    %v221 = vsel %vm219, %v208, 0
    %v224 = vsel %vm219, %v209, 0
    %v227 = vsel %vm219, %v210, 0
    %v230 = vsel %vm219, %v211, 0
    %v233 = vsel %vm219, %v212, 0
    %v236 = vsel %vm219, %v213, 0
    %v239 = vsel %vm219, %v214, 0
    %v242 = vsel %vm219, %v215, 0
    %v245 = vsel %vm219, %v216, 0
    %247 = vmatprep.subr.bf16.mxu0 0
    %248 = vmatpush1.bf16.xpose.msra.mxu0 %v245
    %249 = vmatprep.subr.bf16.mxu0 0
    %250 = vmatpush1.bf16.xpose.msra.mxu0 %v242
    %251 = vmatprep.subr.bf16.mxu0 0
    %252 = vmatpush1.bf16.xpose.msra.mxu0 %v239
    %253 = vmatprep.subr.bf16.mxu0 0
    %254 = vmatpush1.bf16.xpose.msra.mxu0 %v236
    %255 = vmatprep.subr.bf16.mxu0 0
    %256 = vmatpush1.bf16.xpose.msra.mxu0 %v233
    %257 = vmatprep.subr.bf16.mxu0 0
    %258 = vmatpush1.bf16.xpose.msra.mxu0 %v230
    %259 = vmatprep.subr.bf16.mxu0 0
    %260 = vmatpush1.bf16.xpose.msra.mxu0 %v227
    %261 = vmatprep.subr.bf16.mxu0 0
    %262 = vmatpush1.bf16.xpose.msra.mxu0 %v224
    %263 = vmatprep.subr.bf16.mxu0 0
    %264 = vmatpush2.bf16.xpose.msra.mxu0 0
    %265 = vmatprep.subr.bf16.mxu0 0
    %266 = vmatpush2.bf16.xpose.msra.mxu0 0
    %267 = vmatprep.subr.bf16.mxu0 0
    %268 = vmatpush2.bf16.xpose.msra.mxu0 0
    %269 = vmatprep.subr.bf16.mxu0 0
    %270 = vmatpush2.bf16.xpose.msra.mxu0 0
    %271 = vmatprep.subr.bf16.mxu0 0
    %272 = vmatpush2.bf16.xpose.msra.mxu0 0
    %273 = vmatprep.subr.bf16.mxu0 0
    %274 = vmatpush2.bf16.xpose.msra.mxu0 0
    %275 = vmatprep.subr.bf16.mxu0 0
    %276 = vmatpush2.bf16.xpose.msra.mxu0 0
    %277 = vmatprep.subr.bf16.mxu0 0
    %278 = vmatpush2.bf16.xpose.msra.mxu0 0
    %279 = vmatprep.mubr.bf16.mxu0 0
    %280 = vmatmul.mubr.bf16.gmra.mxu0 %v221
    %v281 = vpop.f32.mrf.mxu0
    %v282 = vadd.f32 %v218, %v281
    %v283 = vpop.f32.mrf.mxu0
    %v284 = vpop.f32.mrf.mxu0
    %v285 = vpop.f32.mrf.mxu0
    %286 = vdwg.mxu0
    %v287 = vxor.u32 %v282, 2147483648
    %v288 = vmul.f32 %v287, 1.442695
    %v289 = vpow.pop %v288
    %v290 = vadd.f32 %v289, 1.0
    %v291 = vrcp.pop %v290
    %v292 = vmul.f32 1.0, %v291
    %293 = vst [vmem:[#allocation3] sm:$0x1] %v292
    // Predicated region
    $region22: #{tpu_custom_call.1} parent=1 // pred_check
      _
    $region23: #{tpu_custom_call.1} parent=1 // pred_check_branch
      %295 = sbr.rel (0) target = $region25
    $region24: #{tpu_custom_call.1} parent=1 // pred_region
      %s297 = ssub.s32 16, 16
      %298 = vsyncadd [#allocation4], %s297
      %s300 = sshll.u32 [#allocation3], 4
      %s301 = int_to_ptr.vmem [resolvable:$true] %s300
      %303 = dma.vmem_to_hbm [thread:$0]  %s301, 16, %s5, [#allocation4]
    $region25: #{tpu_custom_call.1} parent=1 // pred_fallthru
      _
    // Predicated region
    $region26: #{tpu_custom_call.1} parent=1 // pred_check
      _
    $region27: #{tpu_custom_call.1} parent=1 // pred_check_branch
      %305 = sbr.rel (0) target = $region29
    $region28: #{tpu_custom_call.1} parent=1 // pred_region
      %306 = dma.done [#allocation4], 16
    $region29: #{tpu_custom_call.1} parent=1 // pred_fallthru
      _
    %307 = vsyncpa [#allocation4], 1

</llo_original>
